<compile_context>
chip_gen: v6e
topology: v6e:2x2x1
jax: 0.10.0
libtpu: 0.0.40
codegen_flags: <defaults>
</compile_context>

<pallas_src>
import functools

import jax
import jax.numpy as jnp
from jax.experimental import pallas as pl
from jax.experimental.pallas import tpu as pltpu

EPS = 1e-5
_TILE_BYTES = 4 * 1024 * 1024      # per-tile f32 footprint budget (v7x-safe)
_VMEM_LIMIT = 32 * 1024 * 1024     # explicit scoped-VMEM limit, safe on all gens


# ----------------------------- tile-size helpers -----------------------------

def _row_tile(n, f, budget):
    """Rows per block for row-streaming kernels (multiple of 8, fits budget)."""
    max_rows = max(1, budget // (f * 4))
    if n <= max_rows:
        return n                      # full-dim block is always legal
    return max(8, (max_rows // 8) * 8)


def _col_tile_single_pass(n, f, budget):
    """Feature columns per block for single-pass BN (full batch per block).
    Returns None if even a 128-wide strip does not fit -> two-pass path."""
    max_cols = budget // (n * 4)
    if f <= max_cols:
        return f
    tf = (max_cols // 128) * 128
    if tf == 0:
        return None
    return min(tf, f)


def _bn_stats_tiles(n, f, budget):
    """(TN, TF) for the two-pass BN stats kernel."""
    tf = f if f <= 128 else min(512, (f // 128) * 128)
    max_rows = max(8, (budget // (tf * 4) // 8) * 8)
    tn = n if n <= max_rows else max_rows
    return tn, tf


# --------------------------------- kernels -----------------------------------

def _layernorm_kernel(x_ref, gamma_ref, beta_ref, o_ref):
    x = x_ref[...].astype(jnp.float32)
    mean = jnp.mean(x, axis=-1, keepdims=True)
    xc = x - mean
    var = jnp.mean(xc * xc, axis=-1, keepdims=True)    # stable form; HBM-bound anyway
    inv = jax.lax.rsqrt(var + EPS)
    o_ref[...] = (xc * inv * gamma_ref[...] + beta_ref[...]).astype(o_ref.dtype)


def _batchnorm_kernel(x_ref, gamma_ref, beta_ref, o_ref):
    # One feature strip, full batch: exact per-feature stats over axis 0.
    x = x_ref[...].astype(jnp.float32)
    mean = jnp.mean(x, axis=0, keepdims=True)
    xc = x - mean
    var = jnp.mean(xc * xc, axis=0, keepdims=True)      # biased variance (PyTorch norm path)
    scale = gamma_ref[...] * jax.lax.rsqrt(var + EPS)
    o_ref[...] = (xc * scale + beta_ref[...]).astype(o_ref.dtype)


def _bn_stats_kernel(x_ref, gamma_ref, beta_ref, scale_ref, shift_ref,
                     sum_ref, sq_ref, *, n_rows, tn, mask_rows):
    # grid = (feature tiles [parallel], batch tiles [arbitrary, reduction last])
    i = pl.program_id(1)
    ni = pl.num_programs(1)

    @pl.when(i == 0)
    def _():
        sum_ref[...] = jnp.zeros_like(sum_ref)
        sq_ref[...] = jnp.zeros_like(sq_ref)

    x = x_ref[...].astype(jnp.float32)
    if mask_rows:  # zero out padded rows of the ragged last batch tile
        row = jax.lax.broadcasted_iota(jnp.int32, x.shape, 0) + i * tn
        x = jnp.where(row < n_rows, x, 0.0)
    sum_ref[...] += jnp.sum(x, axis=0, keepdims=True)
    sq_ref[...] += jnp.sum(x * x, axis=0, keepdims=True)

    @pl.when(i == ni - 1)
    def _():
        inv_n = jnp.float32(1.0 / n_rows)
        mean = sum_ref[...] * inv_n
        var = jnp.maximum(sq_ref[...] * inv_n - mean * mean, 0.0)
        scale = gamma_ref[...] * jax.lax.rsqrt(var + EPS)
        scale_ref[...] = scale
        shift_ref[...] = beta_ref[...] - mean * scale


def _bn_apply_kernel(x_ref, scale_ref, shift_ref, o_ref):
    x = x_ref[...].astype(jnp.float32)
    o_ref[...] = (x * scale_ref[...] + shift_ref[...]).astype(o_ref.dtype)


# ------------------------------- pallas_call wrappers -------------------------

def _layernorm_fwd(x, gamma2, beta2, tn):
    n, f = x.shape
    return pl.pallas_call(
        _layernorm_kernel,
        out_shape=jax.ShapeDtypeStruct((n, f), x.dtype),
        grid_spec=pltpu.PrefetchScalarGridSpec(
            num_scalar_prefetch=0,
            grid=(pl.cdiv(n, tn),),
            in_specs=[
                pl.BlockSpec((tn, f), lambda i: (i, 0)),
                pl.BlockSpec((1, f), lambda i: (0, 0)),
                pl.BlockSpec((1, f), lambda i: (0, 0)),
            ],
            out_specs=pl.BlockSpec((tn, f), lambda i: (i, 0)),
        ),
        compiler_params=pltpu.CompilerParams(
            dimension_semantics=("parallel",),
            vmem_limit_bytes=_VMEM_LIMIT,
        ),
    )(x, gamma2, beta2)


def _batchnorm_single_pass(x, gamma2, beta2, tf):
    n, f = x.shape
    return pl.pallas_call(
        _batchnorm_kernel,
        out_shape=jax.ShapeDtypeStruct((n, f), x.dtype),
        grid_spec=pltpu.PrefetchScalarGridSpec(
            num_scalar_prefetch=0,
            grid=(pl.cdiv(f, tf),),
            in_specs=[
                pl.BlockSpec((n, tf), lambda j: (0, j)),
                pl.BlockSpec((1, tf), lambda j: (0, j)),
                pl.BlockSpec((1, tf), lambda j: (0, j)),
            ],
            out_specs=pl.BlockSpec((n, tf), lambda j: (0, j)),
        ),
        compiler_params=pltpu.CompilerParams(
            dimension_semantics=("parallel",),
            vmem_limit_bytes=_VMEM_LIMIT,
        ),
    )(x, gamma2, beta2)


def _bn_stats(x, gamma2, beta2, tn, tf):
    n, f = x.shape
    kernel = functools.partial(
        _bn_stats_kernel, n_rows=n, tn=tn, mask_rows=(n % tn != 0))
    return pl.pallas_call(
        kernel,
        out_shape=(jax.ShapeDtypeStruct((1, f), jnp.float32),
                   jax.ShapeDtypeStruct((1, f), jnp.float32)),
        grid_spec=pltpu.PrefetchScalarGridSpec(
            num_scalar_prefetch=0,
            grid=(pl.cdiv(f, tf), pl.cdiv(n, tn)),   # reduction (batch) axis last
            in_specs=[
                pl.BlockSpec((tn, tf), lambda j, i: (i, j)),
                pl.BlockSpec((1, tf), lambda j, i: (0, j)),
                pl.BlockSpec((1, tf), lambda j, i: (0, j)),
            ],
            out_specs=(pl.BlockSpec((1, tf), lambda j, i: (0, j)),
                       pl.BlockSpec((1, tf), lambda j, i: (0, j))),
            scratch_shapes=[pltpu.VMEM((1, tf), jnp.float32),
                            pltpu.VMEM((1, tf), jnp.float32)],
        ),
        compiler_params=pltpu.CompilerParams(
            dimension_semantics=("parallel", "arbitrary"),
            vmem_limit_bytes=_VMEM_LIMIT,
        ),
    )(x, gamma2, beta2)


def _bn_apply(x, scale, shift, tn):
    n, f = x.shape
    return pl.pallas_call(
        _bn_apply_kernel,
        out_shape=jax.ShapeDtypeStruct((n, f), x.dtype),
        grid_spec=pltpu.PrefetchScalarGridSpec(
            num_scalar_prefetch=0,
            grid=(pl.cdiv(n, tn),),
            in_specs=[
                pl.BlockSpec((tn, f), lambda i: (i, 0)),
                pl.BlockSpec((1, f), lambda i: (0, 0)),
                pl.BlockSpec((1, f), lambda i: (0, 0)),
            ],
            out_specs=pl.BlockSpec((tn, f), lambda i: (i, 0)),
        ),
        compiler_params=pltpu.CompilerParams(
            dimension_semantics=("parallel",),
            vmem_limit_bytes=_VMEM_LIMIT,
        ),
    )(x, scale, shift)


def conditional_norm(x, gamma, beta, *, use_batchnorm,
                     tile_budget_bytes=_TILE_BYTES):
    """Forward pass of ConditionalNorm. x: (N, F); gamma, beta: (F,)."""
    n, f = x.shape
    gamma2 = gamma.reshape(1, f).astype(jnp.float32)
    beta2 = beta.reshape(1, f).astype(jnp.float32)

    if not use_batchnorm:
        tn = _row_tile(n, f, tile_budget_bytes)
        return _layernorm_fwd(x, gamma2, beta2, tn)

    tf = _col_tile_single_pass(n, f, tile_budget_bytes)
    if tf is not None:
        return _batchnorm_single_pass(x, gamma2, beta2, tf)

    # Very large batch: a full feature column strip does not fit VMEM.
    # Two passes: (1) per-feature scale/shift from accumulated sum / sumsq,
    # (2) streaming affine normalize.
    tn_s, tf_s = _bn_stats_tiles(n, f, tile_budget_bytes)
    scale, shift = _bn_stats(x, gamma2, beta2, tn_s, tf_s)
    tn_a = _row_tile(n, f, tile_budget_bytes)
    return _bn_apply(x, scale, shift, tn_a)


# --------------------------------- reference ----------------------------------

def _reference(x, gamma, beta, use_batchnorm):
    xf = x.astype(jnp.float32)
    if use_batchnorm:
        mean = jnp.mean(xf, axis=0, keepdims=True)
        var = jnp.mean((xf - mean) ** 2, axis=0, keepdims=True)
    else:
        mean = jnp.mean(xf, axis=-1, keepdims=True)
        var = jnp.mean((xf - mean) ** 2, axis=-1, keepdims=True)
    y = (xf - mean) * jax.lax.rsqrt(var + EPS)
    return y * gamma[None, :] + beta[None, :]


if __name__ == "__main__":
    key = jax.random.PRNGKey(0)
    kx, kg, kb, kx2, kg2, kb2 = jax.random.split(key, 6)

    ok = True

    # Primary small shape consistent with the module: (batch, units).
    batch, units = 8, 32
    x = jax.random.normal(kx, (batch, units), dtype=jnp.float32)
    # weight (gamma) ~ ones, bias (beta) ~ zeros (perturbed so the affine path matters).
    gamma = jnp.ones((units,), jnp.float32) + 0.01 * jax.random.normal(kg, (units,), jnp.float32)
    beta = jnp.zeros((units,), jnp.float32) + 0.01 * jax.random.normal(kb, (units,), jnp.float32)

    for use_bn in (False, True):
        out = jax.block_until_ready(conditional_norm(x, gamma, beta, use_batchnorm=use_bn))
        ref = _reference(x, gamma, beta, use_bn)
        ok &= bool(jnp.allclose(out, ref, atol=1e-5, rtol=1e-5))

    # Slightly larger shape to exercise multi-tile grids, ragged edges and the
    # two-pass BatchNorm path (tile paths forced via small tile budgets).
    n2, f2 = 204, 320
    x2 = 2.0 * jax.random.normal(kx2, (n2, f2), dtype=jnp.float32) + 0.5
    g2 = 1.0 + 0.05 * jax.random.normal(kg2, (f2,), dtype=jnp.float32)
    b2 = 0.05 * jax.random.normal(kb2, (f2,), dtype=jnp.float32)

    ref_ln = _reference(x2, g2, b2, False)
    ref_bn = _reference(x2, g2, b2, True)

    # LayerNorm, multi-row-tile path (TN=24, ragged last row tile).
    out = jax.block_until_ready(
        conditional_norm(x2, g2, b2, use_batchnorm=False, tile_budget_bytes=32 * 1024))
    ok &= bool(jnp.allclose(out, ref_ln, atol=2e-4, rtol=2e-4))

    # BatchNorm, single-pass feature-tiled path (TF=128, ragged last feature tile).
    out = jax.block_until_ready(
        conditional_norm(x2, g2, b2, use_batchnorm=True, tile_budget_bytes=n2 * 4 * 140))
    ok &= bool(jnp.allclose(out, ref_bn, atol=2e-4, rtol=2e-4))

    # BatchNorm, two-pass (stats + apply) path with masked ragged batch tiles.
    out = jax.block_until_ready(
        conditional_norm(x2, g2, b2, use_batchnorm=True, tile_budget_bytes=4096))
    ok &= bool(jnp.allclose(out, ref_bn, atol=2e-4, rtol=2e-4))

    if ok:
        print("KERNEL_OK")
</pallas_src>

<mosaic_0001>
module attributes {stable_mosaic.version = 11 : i64} {
  func.func @_layernorm_kernel(%arg0: i32, %arg1: memref<8x32xf32, #tpu.memory_space<vmem>>, %arg2: memref<1x32xf32, #tpu.memory_space<vmem>>, %arg3: memref<1x32xf32, #tpu.memory_space<vmem>>, %arg4: memref<8x32xf32, #tpu.memory_space<vmem>>) attributes {dimension_semantics = [#tpu.dimension_semantics<parallel>], iteration_bounds = array<i64: 1>, scalar_prefetch = 0 : i64, scratch_operands = 0 : i64, tpu.core_type = #tpu.core_type<tc>, window_params = [{transform_indices = @transform_0, window_bounds = array<i64: 8, 32>}, {pipeline_mode = #tpu.pipeline_mode<synchronous>, transform_indices = @transform_1, window_bounds = array<i64: 1, 32>}, {pipeline_mode = #tpu.pipeline_mode<synchronous>, transform_indices = @transform_2, window_bounds = array<i64: 1, 32>}, {transform_indices = @transform_3, window_bounds = array<i64: 8, 32>}]} {
    %c0 = arith.constant 0 : index
    %c0_0 = arith.constant 0 : index
    %0 = vector.load %arg1[%c0, %c0_0] : memref<8x32xf32, #tpu.memory_space<vmem>>, vector<8x32xf32>
    %cst = arith.constant dense<0.000000e+00> : vector<8xf32>
    %1 = vector.multi_reduction <add>, %0, %cst [1] : vector<8x32xf32> to vector<8xf32>
    %2 = vector.shape_cast %1 : vector<8xf32> to vector<8x1xf32>
    %cst_1 = arith.constant 3.200000e+01 : f32
    %3 = vector.broadcast %cst_1 : f32 to vector<8x1xf32>
    %4 = arith.divf %2, %3 : vector<8x1xf32>
    %5 = vector.broadcast %4 : vector<8x1xf32> to vector<8x32xf32>
    %6 = arith.subf %0, %5 : vector<8x32xf32>
    %7 = arith.mulf %6, %6 : vector<8x32xf32>
    %cst_2 = arith.constant dense<0.000000e+00> : vector<8xf32>
    %8 = vector.multi_reduction <add>, %7, %cst_2 [1] : vector<8x32xf32> to vector<8xf32>
    %9 = vector.shape_cast %8 : vector<8xf32> to vector<8x1xf32>
    %cst_3 = arith.constant 3.200000e+01 : f32
    %10 = vector.broadcast %cst_3 : f32 to vector<8x1xf32>
    %11 = arith.divf %9, %10 : vector<8x1xf32>
    %cst_4 = arith.constant 9.99999974E-6 : f32
    %12 = vector.broadcast %cst_4 : f32 to vector<8x1xf32>
    %13 = arith.addf %11, %12 : vector<8x1xf32>
    %14 = math.rsqrt %13 : vector<8x1xf32>
    %15 = vector.broadcast %14 : vector<8x1xf32> to vector<8x32xf32>
    %16 = arith.mulf %6, %15 : vector<8x32xf32>
    %c0_5 = arith.constant 0 : index
    %c0_6 = arith.constant 0 : index
    %17 = vector.load %arg2[%c0_5, %c0_6] : memref<1x32xf32, #tpu.memory_space<vmem>>, vector<1x32xf32>
    %18 = vector.broadcast %17 : vector<1x32xf32> to vector<8x32xf32>
    %19 = arith.mulf %16, %18 : vector<8x32xf32>
    %c0_7 = arith.constant 0 : index
    %c0_8 = arith.constant 0 : index
    %20 = vector.load %arg3[%c0_7, %c0_8] : memref<1x32xf32, #tpu.memory_space<vmem>>, vector<1x32xf32>
    %21 = vector.broadcast %20 : vector<1x32xf32> to vector<8x32xf32>
    %22 = arith.addf %19, %21 : vector<8x32xf32>
    %c0_9 = arith.constant 0 : index
    %c0_10 = arith.constant 0 : index
    %23 = vector.load %arg4[%c0_9, %c0_10] : memref<8x32xf32, #tpu.memory_space<vmem>>, vector<8x32xf32>
    tpu.vector_store %arg4[%c0_9, %c0_10], %22 {strides = array<i32>} : memref<8x32xf32, #tpu.memory_space<vmem>>, vector<8x32xf32>,
    return
  }
  func.func @transform_0(%arg0: i32) -> (i32, i32) {
    %c0_i32 = arith.constant 0 : i32
    %c0_i32_0 = arith.constant 0 : i32
    return %arg0, %c0_i32 : i32, i32
  }
  func.func @transform_1(%arg0: i32) -> (i32, i32) {
    %c0_i32 = arith.constant 0 : i32
    %c0_i32_0 = arith.constant 0 : i32
    %c0_i32_1 = arith.constant 0 : i32
    return %c0_i32, %c0_i32_0 : i32, i32
  }
  func.func @transform_2(%arg0: i32) -> (i32, i32) {
    %c0_i32 = arith.constant 0 : i32
    %c0_i32_0 = arith.constant 0 : i32
    %c0_i32_1 = arith.constant 0 : i32
    return %c0_i32, %c0_i32_0 : i32, i32
  }
  func.func @transform_3(%arg0: i32) -> (i32, i32) {
    %c0_i32 = arith.constant 0 : i32
    %c0_i32_0 = arith.constant 0 : i32
    return %arg0, %c0_i32 : i32, i32
  }
}

</mosaic_0001>

<llo_original>
// kernel: tpu_custom_call.1
$region0: #{tpu_custom_call.1}
  #allocation0 [shape = 'u32[]', space=smem, size = 0x4, offset = 0x4, fixed_abs, tag = 'smem constant byte address 0x4 - core index']
  #allocation1 [shape = 'u32[144,128]{1,0:T(1,128)}', space=vmem, size = 0x12000, scoped, tag = 'internal scratch']
  %s0 = inlined_call_operand.hbm [shape: f32[8,32], index: 0, kind: input, shape index: {}]
  %s1 = inlined_call_operand.vmem [shape: f32[1,32], index: 1, kind: input, shape index: {}]
  %s2 = inlined_call_operand.vmem [shape: f32[1,32], index: 2, kind: input, shape index: {}]
  %s3 = inlined_call_operand.hbm [shape: f32[8,32], index: 3, kind: output, shape index: {}]
  %s4 = sld [smem:[#allocation0]]
  $region26: #{tpu_custom_call.1} parent=0
    _
  %s6 = ssub.s32 1, %s4
  %s7 = scalar_select 0, %s6, %s4
  $region1: #{tpu_custom_call.1} parent=0
    #allocation2 [shape = 'u8[4096]{0}', space=vmem, size = 0x1000, scoped, tag = 'input window, operand 0, single buffered']
    #allocation3 [shape = 's32[1]{0}', space=sflag, size = 0x4, scoped, tag = 'scoped memory for tpu_custom_call.1']
    #allocation4 [shape = 's32[1]{0}', space=sflag, size = 0x4, scoped, tag = 'scoped memory for tpu_custom_call.1']
    #allocation5 [shape = 'u8[4096]{0}', space=vmem, size = 0x1000, scoped, tag = 'output window, operand 0, single buffered']
    %8 = vsyncpa [#allocation3], 0
    %9 = vsyncpa [#allocation4], 0
    // Predicated region
    $region2: #{tpu_custom_call.1} parent=1 // pred_check
      _
    $region3: #{tpu_custom_call.1} parent=1 // pred_check_branch
      %11 = sbr.rel (0) target = $region5
    $region4: #{tpu_custom_call.1} parent=1 // pred_region
      %s13 = ssub.s32 128, 128
      %14 = vsyncadd [#allocation3], %s13
      %s16 = sshll.u32 [#allocation2], 4
      %s17 = int_to_ptr.vmem [resolvable:$true] %s16
      %19 = dma.hbm_to_vmem [thread:$0]  %s0, 128, %s17, [#allocation3]
    $region5: #{tpu_custom_call.1} parent=1 // pred_fallthru
      _
    // Predicated region
    $region6: #{tpu_custom_call.1} parent=1 // pred_check
      _
    $region7: #{tpu_custom_call.1} parent=1 // pred_check_branch
      %21 = sbr.rel (0) target = $region9
    $region8: #{tpu_custom_call.1} parent=1 // pred_region
      _
    $region9: #{tpu_custom_call.1} parent=1 // pred_fallthru
      _
    // Predicated region
    $region10: #{tpu_custom_call.1} parent=1 // pred_check
      _
    $region11: #{tpu_custom_call.1} parent=1 // pred_check_branch
      %23 = sbr.rel (0) target = $region13
    $region12: #{tpu_custom_call.1} parent=1 // pred_region
      _
    $region13: #{tpu_custom_call.1} parent=1 // pred_fallthru
      _
    // Predicated region
    $region14: #{tpu_custom_call.1} parent=1 // pred_check
      _
    $region15: #{tpu_custom_call.1} parent=1 // pred_check_branch
      %25 = sbr.rel (0) target = $region17
    $region16: #{tpu_custom_call.1} parent=1 // pred_region
      %26 = dma.done [#allocation3], 128
    $region17: #{tpu_custom_call.1} parent=1 // pred_fallthru
      _
    %v27 = vld [vmem:[#allocation2] sm:$0xff]
    %vm28 = vcmask 261120
    %v29 = vsel %vm28, %v27, 0.0
    %30 = vadd.xlane.f32.xlu0 %v29
    %v31 = vpop.xlane.xlu0 %30
    %v32 = vrcp.pop 32.0
    %v33 = vmul.f32 %v31, %v32
    %v34 = vsub.f32 %v27, %v33
    %v35 = vmul.f32 %v34, %v34
    %v36 = vsel %vm28, %v35, 0.0
    %37 = vadd.xlane.f32.xlu0 %v36
    %v38 = vpop.xlane.xlu0 %37
    %v39 = vmul.f32 %v38, %v32
    %v40 = vadd.f32 %v39, 1e-05
    %v41 = vrsqrt.pop %v40
    %v42 = vmul.f32 %v34, %v41
    %v43 = vld [vmem:[%s1] sm:$0x1]
    %v45 = vlaneseq
    %v46 = vshrl.u32 %v45, 7
    %v47 = vsub.s32 0, %v46
    %v48 = vrot.slane %v43, %v47
    %v50 = vmul.f32 %v42, %v48
    %v51 = vld [vmem:[%s2] sm:$0x1]
    %v53 = vlaneseq
    %v54 = vshrl.u32 %v53, 7
    %v55 = vsub.s32 0, %v54
    %v56 = vrot.slane %v51, %v55
    %v58 = vadd.f32 %v50, %v56
    %59 = vst.msk [vmem:[#allocation5] sm:$0xff] %vm28, %v58
    // Predicated region
    $region18: #{tpu_custom_call.1} parent=1 // pred_check
      _
    $region19: #{tpu_custom_call.1} parent=1 // pred_check_branch
      %61 = sbr.rel (0) target = $region21
    $region20: #{tpu_custom_call.1} parent=1 // pred_region
      %s63 = ssub.s32 128, 128
      %64 = vsyncadd [#allocation4], %s63
      %s66 = sshll.u32 [#allocation5], 4
      %s67 = int_to_ptr.vmem [resolvable:$true] %s66
      %69 = dma.vmem_to_hbm [thread:$0]  %s67, 128, %s3, [#allocation4]
    $region21: #{tpu_custom_call.1} parent=1 // pred_fallthru
      _
    // Predicated region
    $region22: #{tpu_custom_call.1} parent=1 // pred_check
      _
    $region23: #{tpu_custom_call.1} parent=1 // pred_check_branch
      %71 = sbr.rel (0) target = $region25
    $region24: #{tpu_custom_call.1} parent=1 // pred_region
      %72 = dma.done [#allocation4], 128
    $region25: #{tpu_custom_call.1} parent=1 // pred_fallthru
      _
    %73 = vsyncpa [#allocation3], 1
    %74 = vsyncpa [#allocation4], 1

</llo_original>
